<compile_context>
chip_gen: v5e
topology: v5e:2x2
jax: 0.10.0
libtpu: 0.0.40
codegen_flags: <defaults>
</compile_context>

<pallas_src>
import jax
import jax.numpy as jnp
from jax.experimental import pallas as pl
from jax.experimental.pallas import tpu as pltpu


def _round_up(v, m):
    return (v + m - 1) // m * m


def qnet_kernel(x_ref, w1_ref, b1_ref, w2_ref, b2_ref, w3_ref, b3_ref, o_ref):
    cd = w1_ref.dtype
    # Layer 1: Linear (f32 accumulation on the MXU) + bias + ReLU.
    x = x_ref[...].astype(cd)                      # in-kernel cast (no-op for f32)
    h1 = jnp.dot(x, w1_ref[...], preferred_element_type=jnp.float32)
    h1 = jnp.maximum(h1 + b1_ref[...], 0.0)
    # Layer 2.
    h2 = jnp.dot(h1.astype(cd), w2_ref[...], preferred_element_type=jnp.float32)
    h2 = jnp.maximum(h2 + b2_ref[...], 0.0)
    # Layer 3 (no activation); output block is exactly n_actions wide.
    out = jnp.dot(h2.astype(cd), w3_ref[...], preferred_element_type=jnp.float32)
    o_ref[...] = (out + b3_ref[...]).astype(o_ref.dtype)


def prepare_params(params, compute_dtype=jnp.float32):
    """Cast weights to the MXU compute dtype; biases stay f32 for the VPU add."""
    return {
        "w1": params["w1"].astype(compute_dtype),
        "b1": params["b1"].astype(jnp.float32),
        "w2": params["w2"].astype(compute_dtype),
        "b2": params["b2"].astype(jnp.float32),
        "w3": params["w3"].astype(compute_dtype),
        "b3": params["b3"].astype(jnp.float32),
    }


def _pick_block_b(B, max_block_b, min_parallel_steps):
    """Batch-tile size: multiple of 8 (sublane), large to amortize per-step cost,
    but capped so the grid has >= min_parallel_steps steps when B allows (v7x
    megacore).  For tiny B the block just covers the whole batch."""
    if B <= 8:
        return B  # block dim == full array dim is always legal
    block_b = _round_up(pl.cdiv(B, min_parallel_steps), 8)
    return max(8, min(max_block_b, block_b))


def qnet_forward(x, prepped, *, max_block_b=2048, min_parallel_steps=2):
    """x: (B, n_states) float32.  prepped: output of prepare_params().  Returns
    (B, n_actions) float32 Q-values."""
    w1, b1 = prepped["w1"], prepped["b1"]
    w2, b2 = prepped["w2"], prepped["b2"]
    w3, b3 = prepped["w3"], prepped["b3"]

    B, n_states = x.shape
    n_hidden = w1.shape[1]
    n_actions = w3.shape[1]

    block_b = _pick_block_b(B, max_block_b, min_parallel_steps)
    grid = (pl.cdiv(B, block_b),)  # Pallas handles the trailing partial block

    # x / out march along the batch axis; weights & biases use a constant block
    # index so they are DMA'd once and stay resident in VMEM across the grid.
    in_specs = [
        pl.BlockSpec((block_b, n_states), lambda i: (i, 0)),
        pl.BlockSpec((n_states, n_hidden), lambda i: (0, 0)),
        pl.BlockSpec((1, n_hidden), lambda i: (0, 0)),
        pl.BlockSpec((n_hidden, n_hidden), lambda i: (0, 0)),
        pl.BlockSpec((1, n_hidden), lambda i: (0, 0)),
        pl.BlockSpec((n_hidden, n_actions), lambda i: (0, 0)),
        pl.BlockSpec((1, n_actions), lambda i: (0, 0)),
    ]
    out_specs = pl.BlockSpec((block_b, n_actions), lambda i: (i, 0))
    out_shape = jax.ShapeDtypeStruct((B, n_actions), jnp.float32)

    return pl.pallas_call(
        qnet_kernel,
        out_shape=out_shape,
        grid=grid,
        in_specs=in_specs,
        out_specs=out_specs,
        compiler_params=pltpu.CompilerParams(
            dimension_semantics=("parallel",),   # batch axis shards across v7x TCs
            vmem_limit_bytes=32 * 1024 * 1024,   # explicit; tiles stay far below this
        ),
    )(x, w1, b1, w2, b2, w3, b3)


def init_qnet_params(key, n_states, n_actions, n_hidden=64):
    """Deterministic init mimicking PyTorch nn.Linear default U[-1/sqrt(fan_in), +]."""
    keys = jax.random.split(key, 6)

    def linear(kw, kb, fan_in, fan_out):
        bound = 1.0 / jnp.sqrt(jnp.float32(fan_in))
        w = jax.random.uniform(kw, (fan_in, fan_out), jnp.float32, -bound, bound)
        b = jax.random.uniform(kb, (1, fan_out), jnp.float32, -bound, bound)
        return w, b

    w1, b1 = linear(keys[0], keys[1], n_states, n_hidden)
    w2, b2 = linear(keys[2], keys[3], n_hidden, n_hidden)
    w3, b3 = linear(keys[4], keys[5], n_hidden, n_actions)
    return {"w1": w1, "b1": b1, "w2": w2, "b2": b2, "w3": w3, "b3": b3}


def qnet_reference(x, prepped):
    """Pure-JAX reference using the same dtype recipe as the kernel."""
    cd = prepped["w1"].dtype
    h = jnp.dot(x.astype(cd), prepped["w1"],
                preferred_element_type=jnp.float32) + prepped["b1"]
    h = jnp.maximum(h, 0.0)
    h = jnp.dot(h.astype(cd), prepped["w2"],
                preferred_element_type=jnp.float32) + prepped["b2"]
    h = jnp.maximum(h, 0.0)
    return jnp.dot(h.astype(cd), prepped["w3"],
                   preferred_element_type=jnp.float32) + prepped["b3"]


if __name__ == "__main__":
    n_states, n_actions, n_hidden = 8, 4, 64
    batch = 32  # small, but > one tile so the batch grid / pipeline is exercised

    key = jax.random.PRNGKey(0)
    kx, kp = jax.random.split(key)
    x = jax.random.normal(kx, (batch, n_states), jnp.float32)
    params = init_qnet_params(kp, n_states, n_actions, n_hidden)
    prepped = prepare_params(params)  # f32 weights by default (matches PyTorch QNet)

    out = qnet_forward(x, prepped)
    out = jax.block_until_ready(out)
    assert out.shape == (batch, n_actions), f"bad shape {out.shape}"

    # Same-recipe pure-JAX reference (same dtypes / accumulation).
    ref = qnet_reference(x, prepped)
    assert jnp.allclose(out, ref, atol=1e-3, rtol=1e-3), "mismatch vs JAX reference"

    # Sanity vs the plain f32 PyTorch-equivalent forward (looser: TPU matmul precision).
    f32_ref = jnp.maximum(x @ params["w1"] + params["b1"], 0.0)
    f32_ref = jnp.maximum(f32_ref @ params["w2"] + params["b2"], 0.0)
    f32_ref = f32_ref @ params["w3"] + params["b3"]
    assert jnp.allclose(out, f32_ref, atol=3e-2, rtol=3e-2), "mismatch vs f32 reference"

    print("KERNEL_OK")
</pallas_src>

<mosaic_0001>
module attributes {stable_mosaic.version = 11 : i64} {
  func.func @qnet_kernel(%arg0: i32, %arg1: memref<16x8xf32, #tpu.memory_space<vmem>>, %arg2: memref<8x64xf32, #tpu.memory_space<vmem>>, %arg3: memref<1x64xf32, #tpu.memory_space<vmem>>, %arg4: memref<64x64xf32, #tpu.memory_space<vmem>>, %arg5: memref<1x64xf32, #tpu.memory_space<vmem>>, %arg6: memref<64x4xf32, #tpu.memory_space<vmem>>, %arg7: memref<1x4xf32, #tpu.memory_space<vmem>>, %arg8: memref<16x4xf32, #tpu.memory_space<vmem>>) attributes {dimension_semantics = [#tpu.dimension_semantics<parallel>], iteration_bounds = array<i64: 2>, scalar_prefetch = 0 : i64, scratch_operands = 0 : i64, tpu.core_type = #tpu.core_type<tc>, window_params = [{transform_indices = @transform_0, window_bounds = array<i64: 16, 8>}, {pipeline_mode = #tpu.pipeline_mode<synchronous>, transform_indices = @transform_1, window_bounds = array<i64: 8, 64>}, {pipeline_mode = #tpu.pipeline_mode<synchronous>, transform_indices = @transform_2, window_bounds = array<i64: 1, 64>}, {pipeline_mode = #tpu.pipeline_mode<synchronous>, transform_indices = @transform_3, window_bounds = array<i64: 64, 64>}, {pipeline_mode = #tpu.pipeline_mode<synchronous>, transform_indices = @transform_4, window_bounds = array<i64: 1, 64>}, {pipeline_mode = #tpu.pipeline_mode<synchronous>, transform_indices = @transform_5, window_bounds = array<i64: 64, 4>}, {pipeline_mode = #tpu.pipeline_mode<synchronous>, transform_indices = @transform_6, window_bounds = array<i64: 1, 4>}, {transform_indices = @transform_7, window_bounds = array<i64: 16, 4>}]} {
    %c0 = arith.constant 0 : index
    %c0_0 = arith.constant 0 : index
    %0 = vector.load %arg1[%c0, %c0_0] : memref<16x8xf32, #tpu.memory_space<vmem>>, vector<16x8xf32>
    %c0_1 = arith.constant 0 : index
    %c0_2 = arith.constant 0 : index
    %1 = vector.load %arg2[%c0_1, %c0_2] : memref<8x64xf32, #tpu.memory_space<vmem>>, vector<8x64xf32>
    %cst = arith.constant dense<0.000000e+00> : vector<16x64xf32>
    %2 = tpu.matmul %0, %1, %cst {dimension_numbers = #tpu.dot_dimension_numbers<[1], [0], [0], [1], [0, 0, 1, 1], [], []>} : vector<16x8xf32>, vector<8x64xf32>, vector<16x64xf32> -> vector<16x64xf32>
    %c0_3 = arith.constant 0 : index
    %c0_4 = arith.constant 0 : index
    %3 = vector.load %arg3[%c0_3, %c0_4] : memref<1x64xf32, #tpu.memory_space<vmem>>, vector<1x64xf32>
    %4 = vector.broadcast %3 : vector<1x64xf32> to vector<16x64xf32>
    %5 = arith.addf %2, %4 : vector<16x64xf32>
    %cst_5 = arith.constant 0.000000e+00 : f32
    %6 = vector.broadcast %cst_5 : f32 to vector<16x64xf32>
    %7 = arith.maximumf %5, %6 : vector<16x64xf32>
    %c0_6 = arith.constant 0 : index
    %c0_7 = arith.constant 0 : index
    %8 = vector.load %arg4[%c0_6, %c0_7] : memref<64x64xf32, #tpu.memory_space<vmem>>, vector<64x64xf32>
    %cst_8 = arith.constant dense<0.000000e+00> : vector<16x64xf32>
    %9 = tpu.matmul %7, %8, %cst_8 {dimension_numbers = #tpu.dot_dimension_numbers<[1], [0], [0], [1], [0, 0, 1, 1], [], []>} : vector<16x64xf32>, vector<64x64xf32>, vector<16x64xf32> -> vector<16x64xf32>
    %c0_9 = arith.constant 0 : index
    %c0_10 = arith.constant 0 : index
    %10 = vector.load %arg5[%c0_9, %c0_10] : memref<1x64xf32, #tpu.memory_space<vmem>>, vector<1x64xf32>
    %11 = vector.broadcast %10 : vector<1x64xf32> to vector<16x64xf32>
    %12 = arith.addf %9, %11 : vector<16x64xf32>
    %cst_11 = arith.constant 0.000000e+00 : f32
    %13 = vector.broadcast %cst_11 : f32 to vector<16x64xf32>
    %14 = arith.maximumf %12, %13 : vector<16x64xf32>
    %c0_12 = arith.constant 0 : index
    %c0_13 = arith.constant 0 : index
    %15 = vector.load %arg6[%c0_12, %c0_13] : memref<64x4xf32, #tpu.memory_space<vmem>>, vector<64x4xf32>
    %cst_14 = arith.constant dense<0.000000e+00> : vector<16x4xf32>
    %16 = tpu.matmul %14, %15, %cst_14 {dimension_numbers = #tpu.dot_dimension_numbers<[1], [0], [0], [1], [0, 0, 1, 1], [], []>} : vector<16x64xf32>, vector<64x4xf32>, vector<16x4xf32> -> vector<16x4xf32>
    %c0_15 = arith.constant 0 : index
    %c0_16 = arith.constant 0 : index
    %17 = vector.load %arg7[%c0_15, %c0_16] : memref<1x4xf32, #tpu.memory_space<vmem>>, vector<1x4xf32>
    %18 = vector.broadcast %17 : vector<1x4xf32> to vector<16x4xf32>
    %19 = arith.addf %16, %18 : vector<16x4xf32>
    %c0_17 = arith.constant 0 : index
    %c0_18 = arith.constant 0 : index
    %20 = vector.load %arg8[%c0_17, %c0_18] : memref<16x4xf32, #tpu.memory_space<vmem>>, vector<16x4xf32>
    tpu.vector_store %arg8[%c0_17, %c0_18], %19 {strides = array<i32>} : memref<16x4xf32, #tpu.memory_space<vmem>>, vector<16x4xf32>,
    return
  }
  func.func @transform_0(%arg0: i32) -> (i32, i32) {
    %c0_i32 = arith.constant 0 : i32
    %c0_i32_0 = arith.constant 0 : i32
    return %arg0, %c0_i32 : i32, i32
  }
  func.func @transform_1(%arg0: i32) -> (i32, i32) {
    %c0_i32 = arith.constant 0 : i32
    %c0_i32_0 = arith.constant 0 : i32
    %c0_i32_1 = arith.constant 0 : i32
    return %c0_i32, %c0_i32_0 : i32, i32
  }
  func.func @transform_2(%arg0: i32) -> (i32, i32) {
    %c0_i32 = arith.constant 0 : i32
    %c0_i32_0 = arith.constant 0 : i32
    %c0_i32_1 = arith.constant 0 : i32
    return %c0_i32, %c0_i32_0 : i32, i32
  }
  func.func @transform_3(%arg0: i32) -> (i32, i32) {
    %c0_i32 = arith.constant 0 : i32
    %c0_i32_0 = arith.constant 0 : i32
    %c0_i32_1 = arith.constant 0 : i32
    return %c0_i32, %c0_i32_0 : i32, i32
  }
  func.func @transform_4(%arg0: i32) -> (i32, i32) {
    %c0_i32 = arith.constant 0 : i32
    %c0_i32_0 = arith.constant 0 : i32
    %c0_i32_1 = arith.constant 0 : i32
    return %c0_i32, %c0_i32_0 : i32, i32
  }
  func.func @transform_5(%arg0: i32) -> (i32, i32) {
    %c0_i32 = arith.constant 0 : i32
    %c0_i32_0 = arith.constant 0 : i32
    %c0_i32_1 = arith.constant 0 : i32
    return %c0_i32, %c0_i32_0 : i32, i32
  }
  func.func @transform_6(%arg0: i32) -> (i32, i32) {
    %c0_i32 = arith.constant 0 : i32
    %c0_i32_0 = arith.constant 0 : i32
    %c0_i32_1 = arith.constant 0 : i32
    return %c0_i32, %c0_i32_0 : i32, i32
  }
  func.func @transform_7(%arg0: i32) -> (i32, i32) {
    %c0_i32 = arith.constant 0 : i32
    %c0_i32_0 = arith.constant 0 : i32
    return %arg0, %c0_i32 : i32, i32
  }
}

</mosaic_0001>

<llo_original>
// kernel: tpu_custom_call.1
$region0: #{tpu_custom_call.1}
  #allocation0 [shape = 'u32[]', space=smem, size = 0x4, offset = 0x4, fixed_abs, tag = 'smem constant byte address 0x4 - core index']
  #allocation1 [shape = 'u32[72,128]{1,0:T(1,128)}', space=vmem, size = 0x9000, scoped, tag = 'internal scratch']
  %s0 = inlined_call_operand.vmem [shape: f32[32,8], index: 0, kind: input, shape index: {}]
  %s1 = inlined_call_operand.vmem [shape: f32[8,64], index: 1, kind: input, shape index: {}]
  %s2 = inlined_call_operand.vmem [shape: f32[1,64], index: 2, kind: input, shape index: {}]
  %s3 = inlined_call_operand.vmem [shape: f32[64,64], index: 3, kind: input, shape index: {}]
  %s4 = inlined_call_operand.vmem [shape: f32[1,64], index: 4, kind: input, shape index: {}]
  %s5 = inlined_call_operand.vmem [shape: f32[64,4], index: 5, kind: input, shape index: {}]
  %s6 = inlined_call_operand.vmem [shape: f32[1,4], index: 6, kind: input, shape index: {}]
  %s7 = inlined_call_operand.vmem [shape: f32[32,4], index: 7, kind: output, shape index: {}]
  %s8 = sld [smem:[#allocation0]]
  $region61: #{tpu_custom_call.1} parent=0
    _
  %s10 = ssub.s32 1, %s8
  %s11 = scalar_select 0, %s10, %s8
  loop: start=0, step=1, limit=4
  $region2: #{tpu_custom_call.1} parent=0 // loop_pre_header
    _
  $region3: #{tpu_custom_call.1} parent=0 // loop_header
    %s13 = sphi 0, %s17
    %p14 = scmp.ge.s32.totalorder %s13, 4
    %s23 = sphi 0, %s25
    %s26 = sphi 0, %s23
    %s27 = sphi 0, %s26
    %s43 = sphi 0, %s27
    %s47 = sphi 0, %s47
    %s49 = sphi 0, %s47
    %s50 = sphi 0, %s49
    %s64 = sphi 0, %s50
    %s68 = sphi 0, %s68
    %s70 = sphi 0, %s68
    %s71 = sphi 0, %s70
    %s85 = sphi 0, %s71
    %s89 = sphi 0, %s89
    %s91 = sphi 0, %s89
    %s92 = sphi 0, %s91
    %s106 = sphi 0, %s92
    %s110 = sphi 0, %s110
    %s112 = sphi 0, %s110
    %s113 = sphi 0, %s112
    %s127 = sphi 0, %s113
    %s131 = sphi 0, %s131
    %s133 = sphi 0, %s131
    %s134 = sphi 0, %s133
    %s148 = sphi 0, %s134
    %s152 = sphi 0, %s152
    %s154 = sphi 0, %s152
    %s155 = sphi 0, %s154
    %s169 = sphi 0, %s155
    %s175 = sphi 0, %s177
    %s178 = sphi 0, %s175
    %s179 = sphi 0, %s178
    %s195 = sphi 0, %s179
  $region4: #{tpu_custom_call.1} parent=0 // loop_header_branch
    %16 = sbr.rel (%p14) target = $region8
  $region5: #{tpu_custom_call.1} parent=0 // loop_body
    %s18 = ssub.s32 %s13, 1
    %s19 = ssub.s32 %s13, 2
    %s20 = sadd.s32 %s13, 1
    %s21 = ssub.s32 %s13, %s20
    %p22 = scmp.eq.s32.totalorder %s21, 0
    %s24 = sadd.s32 %s23, 1
    %s25 = scalar_select %p22, %s23, %s24
    %p28 = pneg %p22
    %p29 = scmp.eq.s32.totalorder %s13, 1
    %p30 = por %p28, %p29
    %p31 = scmp.ne.s32.totalorder %s23, %s26
    %p32 = scmp.eq.s32.totalorder %s13, 0
    %p33 = por %p31, %p32
    %p34 = scmp.ne.s32.totalorder %s23, %s26
    %p35 = scmp.eq.s32.totalorder %s18, 1
    %p36 = por %p34, %p35
    %p37 = scmp.ne.s32.totalorder %s26, %s27
    %p38 = scmp.eq.s32.totalorder %s18, 0
    %p39 = por %p37, %p38
    %p40 = scmp.ne.s32.totalorder %s26, %s27
    %p41 = scmp.eq.s32.totalorder %s19, 1
    %p42 = por %p40, %p41
    %p44 = scmp.ne.s32.totalorder %s27, %s43
    %p45 = scmp.eq.s32.totalorder %s19, 0
    %p46 = por %p44, %p45
    %s48 = sadd.s32 %s47, 1
    %p51 = scmp.eq.s32.totalorder %s13, 1
    %p52 = scmp.ne.s32.totalorder %s47, %s49
    %p53 = scmp.eq.s32.totalorder %s13, 0
    %p54 = por %p52, %p53
    %p55 = scmp.ne.s32.totalorder %s47, %s49
    %p56 = scmp.eq.s32.totalorder %s18, 1
    %p57 = por %p55, %p56
    %p58 = scmp.ne.s32.totalorder %s49, %s50
    %p59 = scmp.eq.s32.totalorder %s18, 0
    %p60 = por %p58, %p59
    %p61 = scmp.ne.s32.totalorder %s49, %s50
    %p62 = scmp.eq.s32.totalorder %s19, 1
    %p63 = por %p61, %p62
    %p65 = scmp.ne.s32.totalorder %s50, %s64
    %p66 = scmp.eq.s32.totalorder %s19, 0
    %p67 = por %p65, %p66
    %s69 = sadd.s32 %s68, 1
    %p72 = scmp.eq.s32.totalorder %s13, 1
    %p73 = scmp.ne.s32.totalorder %s68, %s70
    %p74 = scmp.eq.s32.totalorder %s13, 0
    %p75 = por %p73, %p74
    %p76 = scmp.ne.s32.totalorder %s68, %s70
    %p77 = scmp.eq.s32.totalorder %s18, 1
    %p78 = por %p76, %p77
    %p79 = scmp.ne.s32.totalorder %s70, %s71
    %p80 = scmp.eq.s32.totalorder %s18, 0
    %p81 = por %p79, %p80
    %p82 = scmp.ne.s32.totalorder %s70, %s71
    %p83 = scmp.eq.s32.totalorder %s19, 1
    %p84 = por %p82, %p83
    %p86 = scmp.ne.s32.totalorder %s71, %s85
    %p87 = scmp.eq.s32.totalorder %s19, 0
    %p88 = por %p86, %p87
    %s90 = sadd.s32 %s89, 1
    %p93 = scmp.eq.s32.totalorder %s13, 1
    %p94 = scmp.ne.s32.totalorder %s89, %s91
    %p95 = scmp.eq.s32.totalorder %s13, 0
    %p96 = por %p94, %p95
    %p97 = scmp.ne.s32.totalorder %s89, %s91
    %p98 = scmp.eq.s32.totalorder %s18, 1
    %p99 = por %p97, %p98
    %p100 = scmp.ne.s32.totalorder %s91, %s92
    %p101 = scmp.eq.s32.totalorder %s18, 0
    %p102 = por %p100, %p101
    %p103 = scmp.ne.s32.totalorder %s91, %s92
    %p104 = scmp.eq.s32.totalorder %s19, 1
    %p105 = por %p103, %p104
    %p107 = scmp.ne.s32.totalorder %s92, %s106
    %p108 = scmp.eq.s32.totalorder %s19, 0
    %p109 = por %p107, %p108
    %s111 = sadd.s32 %s110, 1
    %p114 = scmp.eq.s32.totalorder %s13, 1
    %p115 = scmp.ne.s32.totalorder %s110, %s112
    %p116 = scmp.eq.s32.totalorder %s13, 0
    %p117 = por %p115, %p116
    %p118 = scmp.ne.s32.totalorder %s110, %s112
    %p119 = scmp.eq.s32.totalorder %s18, 1
    %p120 = por %p118, %p119
    %p121 = scmp.ne.s32.totalorder %s112, %s113
    %p122 = scmp.eq.s32.totalorder %s18, 0
    %p123 = por %p121, %p122
    %p124 = scmp.ne.s32.totalorder %s112, %s113
    %p125 = scmp.eq.s32.totalorder %s19, 1
    %p126 = por %p124, %p125
    %p128 = scmp.ne.s32.totalorder %s113, %s127
    %p129 = scmp.eq.s32.totalorder %s19, 0
    %p130 = por %p128, %p129
    %s132 = sadd.s32 %s131, 1
    %p135 = scmp.eq.s32.totalorder %s13, 1
    %p136 = scmp.ne.s32.totalorder %s131, %s133
    %p137 = scmp.eq.s32.totalorder %s13, 0
    %p138 = por %p136, %p137
    %p139 = scmp.ne.s32.totalorder %s131, %s133
    %p140 = scmp.eq.s32.totalorder %s18, 1
    %p141 = por %p139, %p140
    %p142 = scmp.ne.s32.totalorder %s133, %s134
    %p143 = scmp.eq.s32.totalorder %s18, 0
    %p144 = por %p142, %p143
    %p145 = scmp.ne.s32.totalorder %s133, %s134
    %p146 = scmp.eq.s32.totalorder %s19, 1
    %p147 = por %p145, %p146
    %p149 = scmp.ne.s32.totalorder %s134, %s148
    %p150 = scmp.eq.s32.totalorder %s19, 0
    %p151 = por %p149, %p150
    %s153 = sadd.s32 %s152, 1
    %p156 = scmp.eq.s32.totalorder %s13, 1
    %p157 = scmp.ne.s32.totalorder %s152, %s154
    %p158 = scmp.eq.s32.totalorder %s13, 0
    %p159 = por %p157, %p158
    %p160 = scmp.ne.s32.totalorder %s152, %s154
    %p161 = scmp.eq.s32.totalorder %s18, 1
    %p162 = por %p160, %p161
    %p163 = scmp.ne.s32.totalorder %s154, %s155
    %p164 = scmp.eq.s32.totalorder %s18, 0
    %p165 = por %p163, %p164
    %p166 = scmp.ne.s32.totalorder %s154, %s155
    %p167 = scmp.eq.s32.totalorder %s19, 1
    %p168 = por %p166, %p167
    %p170 = scmp.ne.s32.totalorder %s155, %s169
    %p171 = scmp.eq.s32.totalorder %s19, 0
    %p172 = por %p170, %p171
    %s173 = ssub.s32 %s13, %s20
    %p174 = scmp.eq.s32.totalorder %s173, 0
    %s176 = sadd.s32 %s175, 1
    %s177 = scalar_select %p174, %s175, %s176
    %p180 = pneg %p174
    %p181 = scmp.eq.s32.totalorder %s13, 1
    %p182 = por %p180, %p181
    %p183 = scmp.ne.s32.totalorder %s175, %s178
    %p184 = scmp.eq.s32.totalorder %s13, 0
    %p185 = por %p183, %p184
    %p186 = scmp.ne.s32.totalorder %s175, %s178
    %p187 = scmp.eq.s32.totalorder %s18, 1
    %p188 = por %p186, %p187
    %p189 = scmp.ne.s32.totalorder %s178, %s179
    %p190 = scmp.eq.s32.totalorder %s18, 0
    %p191 = por %p189, %p190
    %p192 = scmp.ne.s32.totalorder %s178, %s179
    %p193 = scmp.eq.s32.totalorder %s19, 1
    %p194 = por %p192, %p193
    %p196 = scmp.ne.s32.totalorder %s179, %s195
    %p197 = scmp.eq.s32.totalorder %s19, 0
    %p198 = por %p196, %p197
    %p199 = scmp.le.s32.totalorder 1, %s13
    %p200 = scmp.lt.s32.totalorder %s13, 3
    %p201 = pnand %p199, %p200
    %p202 = pneg %p201
    // Predicated region
    $region9: #{tpu_custom_call.1} parent=5 // pred_check
      _
    $region10: #{tpu_custom_call.1} parent=5 // pred_check_branch
      %204 = sbr.rel (%p201) target = $region12
    $region11: #{tpu_custom_call.1} parent=5 // pred_region
      %s205 = ssub.s32 %s13, 1
      // Predicated region
      $region13: #{tpu_custom_call.1} parent=11 // pred_check
        %p206 = pneg %p60
      $region14: #{tpu_custom_call.1} parent=11 // pred_check_branch
        %208 = sbr.rel (%p206) target = $region16
      $region15: #{tpu_custom_call.1} parent=11 // pred_region
        _
      $region16: #{tpu_custom_call.1} parent=11 // pred_fallthru
        _
      // Predicated region
      $region17: #{tpu_custom_call.1} parent=11 // pred_check
        %p209 = pneg %p81
      $region18: #{tpu_custom_call.1} parent=11 // pred_check_branch
        %211 = sbr.rel (%p209) target = $region20
      $region19: #{tpu_custom_call.1} parent=11 // pred_region
        _
      $region20: #{tpu_custom_call.1} parent=11 // pred_fallthru
        _
      // Predicated region
      $region21: #{tpu_custom_call.1} parent=11 // pred_check
        %p212 = pneg %p102
      $region22: #{tpu_custom_call.1} parent=11 // pred_check_branch
        %214 = sbr.rel (%p212) target = $region24
      $region23: #{tpu_custom_call.1} parent=11 // pred_region
        _
      $region24: #{tpu_custom_call.1} parent=11 // pred_fallthru
        _
      // Predicated region
      $region25: #{tpu_custom_call.1} parent=11 // pred_check
        %p215 = pneg %p123
      $region26: #{tpu_custom_call.1} parent=11 // pred_check_branch
        %217 = sbr.rel (%p215) target = $region28
      $region27: #{tpu_custom_call.1} parent=11 // pred_region
        _
      $region28: #{tpu_custom_call.1} parent=11 // pred_fallthru
        _
      // Predicated region
      $region29: #{tpu_custom_call.1} parent=11 // pred_check
        %p218 = pneg %p144
      $region30: #{tpu_custom_call.1} parent=11 // pred_check_branch
        %220 = sbr.rel (%p218) target = $region32
      $region31: #{tpu_custom_call.1} parent=11 // pred_region
        _
      $region32: #{tpu_custom_call.1} parent=11 // pred_fallthru
        _
      // Predicated region
      $region33: #{tpu_custom_call.1} parent=11 // pred_check
        %p221 = pneg %p165
      $region34: #{tpu_custom_call.1} parent=11 // pred_check_branch
        %223 = sbr.rel (%p221) target = $region36
      $region35: #{tpu_custom_call.1} parent=11 // pred_region
        _
      $region36: #{tpu_custom_call.1} parent=11 // pred_fallthru
        _
    $region12: #{tpu_custom_call.1} parent=5 // pred_fallthru
      _
    %p224 = scmp.lt.s32.totalorder %s13, 2
    // Predicated region
    $region37: #{tpu_custom_call.1} parent=5 // pred_check
      %p225 = pneg %p224
    $region38: #{tpu_custom_call.1} parent=5 // pred_check_branch
      %227 = sbr.rel (%p225) target = $region40
    $region39: #{tpu_custom_call.1} parent=5 // pred_region
      // Predicated region
      $region41: #{tpu_custom_call.1} parent=39 // pred_check
        %p228 = pneg %p33
      $region42: #{tpu_custom_call.1} parent=39 // pred_check_branch
        %230 = sbr.rel (%p228) target = $region44
      $region43: #{tpu_custom_call.1} parent=39 // pred_region
        %s231 = smul.u32 2, %s13
        %p232 = scmp.lt.s32.totalorder %s231, 3
        %s233 = scalar_select %p232, %s231, 3
        %s234 = smul.addr %s233, 8
        %s235 = scalar_lea.vmem %s0, %s234
        %s236 = smul.u32 2, %s13
      $region44: #{tpu_custom_call.1} parent=39 // pred_fallthru
        _
    $region40: #{tpu_custom_call.1} parent=5 // pred_fallthru
      _
    %p237 = scmp.le.s32.totalorder 1, %s13
    %p238 = scmp.lt.s32.totalorder %s13, 3
    %p239 = pnand %p237, %p238
    %p240 = pneg %p239
    // Predicated region
    $region45: #{tpu_custom_call.1} parent=5 // pred_check
      _
    $region46: #{tpu_custom_call.1} parent=5 // pred_check_branch
      %242 = sbr.rel (%p239) target = $region48
    $region47: #{tpu_custom_call.1} parent=5 // pred_region
      %s243 = ssub.s32 %s13, 1
      %s244 = smul.u32 2, %s18
      %p245 = scmp.lt.s32.totalorder %s244, 3
      %s246 = scalar_select %p245, %s244, 3
      %s247 = smul.addr %s246, 8
      %s248 = scalar_lea.vmem %s0, %s247
      %p249 = pneg %p39
      %p250 = pneg %p36
      %p251 = pneg %p60
      %p252 = pneg %p57
      %p253 = pneg %p81
      %p254 = pneg %p78
      %p255 = pneg %p102
      %p256 = pneg %p99
      %p257 = pneg %p123
      %p258 = pneg %p120
      %p259 = pneg %p144
      %p260 = pneg %p141
      %p261 = pneg %p165
      %p262 = pneg %p162
      %p263 = pneg %p191
      %p264 = pneg %p188
      %s265 = smul.u32 2, %s18
      %p266 = scmp.lt.s32.totalorder %s265, 3
      %s267 = scalar_select %p266, %s265, 3
      %s268 = smul.addr %s267, 8
      %s269 = scalar_lea.vmem %s7, %s268
      %s270 = smul.u32 2, %s18
      %p271 = scmp.lt.s32.totalorder %s270, 3
      %s272 = scalar_select %p271, %s270, 3
      %s273 = smul.addr %s272, 8
      %s274 = scalar_lea.vmem %s0, %s273
      %s275 = smul.u32 2, %s18
      %s276 = smul.u32 2, %s18
      %p277 = scmp.lt.s32.totalorder %s276, 3
      %s278 = scalar_select %p277, %s276, 3
      %s279 = smul.addr %s278, 8
      %s280 = scalar_lea.vmem %s7, %s279
      %s281 = smul.u32 2, %s18
      %v282 = vld [vmem:[%s274] sm:$0xff]
      %v283 = vld [vmem:[%s274 + $0x8] sm:$0xff]
      %v284 = vld [vmem:[%s1] sm:$0xff]
      %v285 = vld [vmem:[%s2] sm:$0x1]
      %v287 = vperm.slane %v285, 0
      %vm289 = vcmask 64512
      %v291 = vsel %vm289, %v282, 0
      %v294 = vsel %vm289, %v283, 0
      %296 = vmatpush.msra.mxu0 0.0
      %297 = vmatpush.msra.mxu0 0.0
      %298 = vmatpush.msra.mxu0 0.0
      %299 = vmatpush.msra.mxu0 0.0
      %300 = vmatpush.msra.mxu0 0.0
      %301 = vmatpush.msra.mxu0 0.0
      %302 = vmatpush.msra.mxu0 0.0
      %303 = vmatpush.msra.mxu0 0.0
      %304 = vmatpush.msra.mxu0 0.0
      %305 = vmatpush.msra.mxu0 0.0
      %306 = vmatpush.msra.mxu0 0.0
      %307 = vmatpush.msra.mxu0 0.0
      %308 = vmatpush.msra.mxu0 0.0
      %309 = vmatpush.msra.mxu0 0.0
      %310 = vmatpush.msra.mxu0 0.0
      %311 = vmatpush.msra.mxu0 %v284
      %312 = vmatmul.f32.gmra.mxu0 %v291
      %v313 = vpop.f32.mrf.mxu0
      %v314 = vadd.f32 %v287, %v313
      %315 = vmatmul.f32.gmra.mxu0 %v294
      %v316 = vpop.f32.mrf.mxu0
      %v317 = vadd.f32 %v287, %v316
      %318 = vdwg.mxu0
      %v319 = vmax.f32 %v314, 0.0
      %v320 = vmax.f32 %v317, 0.0
      %v321 = vld [vmem:[%s3] sm:$0xff]
      %v322 = vld [vmem:[%s3 + $0x8] sm:$0xff]
      %v323 = vld [vmem:[%s3 + $0x10] sm:$0xff]
      %v324 = vld [vmem:[%s3 + $0x18] sm:$0xff]
      %v325 = vld [vmem:[%s3 + $0x20] sm:$0xff]
      %v326 = vld [vmem:[%s3 + $0x28] sm:$0xff]
      %v327 = vld [vmem:[%s3 + $0x30] sm:$0xff]
      %v328 = vld [vmem:[%s3 + $0x38] sm:$0xff]
      %v329 = vld [vmem:[%s4] sm:$0x1]
      %v331 = vperm.slane %v329, 0
      %vm333 = vcmask 523264
      %v335 = vsel %vm333, %v319, 0
      %v338 = vsel %vm333, %v320, 0
      %340 = vmatpush.msra.mxu0 0.0
      %341 = vmatpush.msra.mxu0 0.0
      %342 = vmatpush.msra.mxu0 0.0
      %343 = vmatpush.msra.mxu0 0.0
      %344 = vmatpush.msra.mxu0 0.0
      %345 = vmatpush.msra.mxu0 0.0
      %346 = vmatpush.msra.mxu0 0.0
      %347 = vmatpush.msra.mxu0 0.0
      %348 = vmatpush.msra.mxu0 %v328
      %349 = vmatpush.msra.mxu0 %v327
      %350 = vmatpush.msra.mxu0 %v326
      %351 = vmatpush.msra.mxu0 %v325
      %352 = vmatpush.msra.mxu0 %v324
      %353 = vmatpush.msra.mxu0 %v323
      %354 = vmatpush.msra.mxu0 %v322
      %355 = vmatpush.msra.mxu0 %v321
      %356 = vmatmul.f32.gmra.mxu0 %v335
      %v357 = vpop.f32.mrf.mxu0
      %v358 = vadd.f32 %v331, %v357
      %359 = vmatmul.f32.gmra.mxu0 %v338
      %v360 = vpop.f32.mrf.mxu0
      %v361 = vadd.f32 %v331, %v360
      %362 = vdwg.mxu0
      %v363 = vmax.f32 %v358, 0.0
      %v364 = vmax.f32 %v361, 0.0
      %v365 = vld [vmem:[%s5] sm:$0xff]
      %v366 = vld [vmem:[%s5 + $0x8] sm:$0xff]
      %v367 = vld [vmem:[%s5 + $0x10] sm:$0xff]
      %v368 = vld [vmem:[%s5 + $0x18] sm:$0xff]
      %v369 = vld [vmem:[%s5 + $0x20] sm:$0xff]
      %v370 = vld [vmem:[%s5 + $0x28] sm:$0xff]
      %v371 = vld [vmem:[%s5 + $0x30] sm:$0xff]
      %v372 = vld [vmem:[%s5 + $0x38] sm:$0xff]
      %v373 = vld [vmem:[%s6] sm:$0x1]
      %v375 = vperm.slane %v373, 0
      %v378 = vsel %vm333, %v363, 0
      %v381 = vsel %vm333, %v364, 0
      %383 = vmatpush.msra.mxu0 0.0
      %384 = vmatpush.msra.mxu0 0.0
      %385 = vmatpush.msra.mxu0 0.0
      %386 = vmatpush.msra.mxu0 0.0
      %387 = vmatpush.msra.mxu0 0.0
      %388 = vmatpush.msra.mxu0 0.0
      %389 = vmatpush.msra.mxu0 0.0
      %390 = vmatpush.msra.mxu0 0.0
      %391 = vmatpush.msra.mxu0 %v372
      %392 = vmatpush.msra.mxu0 %v371
      %393 = vmatpush.msra.mxu0 %v370
      %394 = vmatpush.msra.mxu0 %v369
      %395 = vmatpush.msra.mxu0 %v368
      %396 = vmatpush.msra.mxu0 %v367
      %397 = vmatpush.msra.mxu0 %v366
      %398 = vmatpush.msra.mxu0 %v365
      %399 = vmatmul.f32.gmra.mxu0 %v378
      %v400 = vpop.f32.mrf.mxu0
      %v401 = vadd.f32 %v375, %v400
      %402 = vmatmul.f32.gmra.mxu0 %v381
      %v403 = vpop.f32.mrf.mxu0
      %v404 = vadd.f32 %v375, %v403
      %405 = vdwg.mxu0
      %vm406 = vcmask 31744
      %407 = vst.msk [vmem:[%s280] sm:$0xff] %vm406, %v401
      %408 = vst.msk [vmem:[%s280 + $0x8] sm:$0xff] %vm406, %v404
      %s409 = smul.u32 2, %s18
      %p410 = scmp.lt.s32.totalorder %s409, 3
      %s411 = scalar_select %p410, %s409, 3
      %s412 = smul.addr %s411, 8
      %s413 = scalar_lea.vmem %s7, %s412
      // Predicated region
      $region49: #{tpu_custom_call.1} parent=47 // pred_check
        %p414 = pneg %p188
      $region50: #{tpu_custom_call.1} parent=47 // pred_check_branch
        %416 = sbr.rel (%p414) target = $region52
      $region51: #{tpu_custom_call.1} parent=47 // pred_region
        %s417 = smul.u32 2, %s18
      $region52: #{tpu_custom_call.1} parent=47 // pred_fallthru
        _
    $region48: #{tpu_custom_call.1} parent=5 // pred_fallthru
      _
    %p418 = scmp.le.s32.totalorder 2, %s13
    // Predicated region
    $region53: #{tpu_custom_call.1} parent=5 // pred_check
      %p419 = pneg %p418
    $region54: #{tpu_custom_call.1} parent=5 // pred_check_branch
      %421 = sbr.rel (%p419) target = $region56
    $region55: #{tpu_custom_call.1} parent=5 // pred_region
      %s422 = ssub.s32 %s13, 2
      // Predicated region
      $region57: #{tpu_custom_call.1} parent=55 // pred_check
        %p423 = pneg %p194
      $region58: #{tpu_custom_call.1} parent=55 // pred_check_branch
        %425 = sbr.rel (%p423) target = $region60
      $region59: #{tpu_custom_call.1} parent=55 // pred_region
        %s426 = smul.u32 2, %s19
        %p427 = scmp.lt.s32.totalorder %s426, 3
        %s428 = scalar_select %p427, %s426, 3
        %s429 = smul.addr %s428, 8
        %s430 = scalar_lea.vmem %s7, %s429
      $region60: #{tpu_custom_call.1} parent=55 // pred_fallthru
        _
    $region56: #{tpu_custom_call.1} parent=5 // pred_fallthru
      _
  $region6: #{tpu_custom_call.1} parent=0 // loop_footer
    %s17 = sadd.s32 1, %s13
  $region7: #{tpu_custom_call.1} parent=0 // loop_footer_branch
    %12 = sbr.rel target = $region3
  $region8: #{tpu_custom_call.1} parent=0 // loop_exit
    _

</llo_original>
